<compile_context>
chip_gen: v7x
topology: tpu7x:2x2x1
jax: 0.10.0
libtpu: 0.0.40
codegen_flags: <defaults>
</compile_context>

<pallas_src>
import jax
import jax.numpy as jnp
from jax import lax
from jax.experimental import pallas as pl
from jax.experimental.pallas import tpu as pltpu

WINDOW = 3
CLIP = (WINDOW - 1) // 2          # = 1
C1 = 0.01 ** 2
C2 = 0.03 ** 2
# Pool normalizations folded into the constants: mu sums carry a factor 9,
# sigma sums a factor 9^3 = 729; both cancel between numerator/denominator.
C1_S = 81.0 * C1                  # C1 * 9^2
C2_S = 729.0 * C2                 # C2 * 9^3


def ssim_kernel(x_ref, y_ref, o_ref):
    x = x_ref[...].astype(jnp.float32)            # (BH, W), f32 everywhere
    y = y_ref[...].astype(jnp.float32)
    bh, w = x.shape

    def shift(a, dh, dw):
        # result[i, j] = a[i + dh, j + dw] with wrap-around; the wrapped
        # rows/cols only affect the 4-row / 4-col halo the wrapper discards.
        if dh:
            a = pltpu.roll(a, (bh - dh) % bh, axis=0)
        if dw:
            a = pltpu.roll(a, (w - dw) % w, axis=1)
        return a

    def sum3x3(a):
        # Unscaled valid 3x3 box sum anchored at the window's top-left corner:
        # separable 3-tap sums along lanes then sublanes (full-width rolls).
        aw = a + shift(a, 0, 1) + shift(a, 0, 2)
        return aw + shift(aw, 1, 0) + shift(aw, 2, 0)

    sx = sum3x3(x)                 # 9 * mu_x   (anchored at window top-left)
    sy = sum3x3(y)
    xc = shift(x, 1, 1)            # window-center samples, same anchoring
    yc = shift(y, 1, 1)

    dx = 9.0 * xc - sx             # 9 * (x_center - mu_x)
    dy = 9.0 * yc - sy

    pxx = sum3x3(dx * dx)          # 729 * sigma_x   (anchored at output pixel)
    pyy = sum3x3(dy * dy)          # 729 * sigma_y
    pxy = sum3x3(dx * dy)          # 729 * sigma_xy

    sxc = shift(sx, 1, 1)          # 9 * mu_x at the output pixel
    syc = shift(sy, 1, 1)          # 9 * mu_y at the output pixel

    # Numerator and denominator both carry the factor 81 * 729, so it cancels.
    ssim_n = (2.0 * sxc * syc + C1_S) * (2.0 * pxy + C2_S)
    ssim_d = (sxc * sxc + syc * syc + C1_S) * (pxx + pyy + C2_S)
    # ssim_d >= (81*C1)*(729*C2) > 0 everywhere (halo included), so the
    # reciprocal is safe.  approx=False keeps full f32 accuracy; approx=True
    # (~2^-12 rel. error) would be cheaper on v7x but exceeds the reference
    # tolerance used below.
    ssim = ssim_n * pl.reciprocal(ssim_d, approx=False)

    # Single unmasked, lane-dense full-block store; the 4-row / 4-col halo
    # holds deterministic (clipped) garbage and is sliced off by the wrapper.
    o_ref[...] = jnp.clip(1.0 - ssim, 0.0, 2.0).astype(o_ref.dtype)


def _vmem_capacity_bytes():
    """Physical VMEM per core (generation-aware tiling; v7x has 64 MiB)."""
    try:
        info = pltpu.get_tpu_info()
        cap = getattr(info, "vmem_capacity_bytes", None)
        if cap:
            return int(cap)
    except Exception:
        pass
    return 64 << 20                 # conservative (v7x-sized) fallback


def _pick_batch(nc, h, w, itemsize, vmem_cap_bytes):
    """How many (n, c) image slices to process per grid step.

    Largest divisor B of nc whose input block stays under a per-generation
    VMEM budget, preferring a grid of length >= 2 (and even when possible)
    so v7x can shard the "parallel" axis across both TensorCores."""
    if vmem_cap_bytes >= (100 << 20):        # v5e / v6e: 128 MiB physical VMEM
        budget = 3 << 19                     # ~1.5 MiB per input block
    else:                                    # v7x: 64 MiB physical VMEM
        budget = 768 << 10                   # ~0.75 MiB per input block
    divs = [b for b in range(1, nc + 1) if nc % b == 0]
    fitting = [b for b in divs if b * h * w * itemsize <= budget] or [1]

    def pref(b):
        g = nc // b
        return (g >= 2, g % 2 == 0, b)       # splittable grid, even grid, big block

    return max(fitting, key=pref)


def ssim_pallas(x, y):
    """x, y: (N, C, H, W) float32 -> (N, C, H-4, W-4) SSIM loss map."""
    N, C, H, W = x.shape
    Ho = H - 2 * (WINDOW - 1)
    Wo = W - 2 * (WINDOW - 1)
    NC = N * C

    # Pad each image's spatial dims up to the (8, 128) f32 tile so every
    # block (and every rotate) is tile-aligned and every store is unmasked.
    # Padded rows/cols only feed the discarded halo.
    Hp = ((H + 7) // 8) * 8
    Wp = ((W + 127) // 128) * 128
    if (Hp, Wp) != (H, W):
        pad = ((0, 0), (0, 0), (0, Hp - H), (0, Wp - W))
        x = jnp.pad(x, pad)
        y = jnp.pad(y, pad)

    vmem_cap = _vmem_capacity_bytes()
    B = _pick_batch(NC, Hp, Wp, x.dtype.itemsize, vmem_cap)
    grid = (NC // B,)
    blk = (B * Hp, Wp)
    blk_bytes = B * Hp * Wp * x.dtype.itemsize
    # 6 double-buffered in/out blocks + ~16-18 full-block f32 temporaries,
    # with headroom; clamp well under physical VMEM.
    vmem_limit = int(min(max(32 << 20, 24 * blk_bytes), (vmem_cap * 3) // 4))

    xf = x.reshape(NC * Hp, Wp)
    yf = y.reshape(NC * Hp, Wp)

    out = pl.pallas_call(
        ssim_kernel,
        out_shape=jax.ShapeDtypeStruct((NC * Hp, Wp), x.dtype),
        grid_spec=pltpu.PrefetchScalarGridSpec(
            num_scalar_prefetch=0,
            grid=grid,
            in_specs=[
                pl.BlockSpec(blk, lambda i: (i, 0)),
                pl.BlockSpec(blk, lambda i: (i, 0)),
            ],
            out_specs=pl.BlockSpec(blk, lambda i: (i, 0)),
        ),
        compiler_params=pltpu.CompilerParams(
            dimension_semantics=("parallel",),
            vmem_limit_bytes=vmem_limit,
        ),
    )(xf, yf)

    # Halo / padding removal out here (reshape + one slice).
    return out.reshape(N, C, Hp, Wp)[:, :, :Ho, :Wo]


# ---------------- pure-JAX reference (for correctness check) ----------------
def _avgpool3_ref(a):
    s = lax.reduce_window(a, 0.0, lax.add,
                          (1, 1, WINDOW, WINDOW), (1, 1, 1, 1), "VALID")
    return s / float(WINDOW * WINDOW)


def ssim_ref(x, y):
    mu_x = _avgpool3_ref(x)
    mu_y = _avgpool3_ref(y)
    xc = x[:, :, CLIP:-CLIP, CLIP:-CLIP]
    yc = y[:, :, CLIP:-CLIP, CLIP:-CLIP]
    sigma_x = _avgpool3_ref((xc - mu_x) ** 2)
    sigma_y = _avgpool3_ref((yc - mu_y) ** 2)
    sigma_xy = _avgpool3_ref((xc - mu_x) * (yc - mu_y))
    mu_xc = mu_x[:, :, CLIP:-CLIP, CLIP:-CLIP]
    mu_yc = mu_y[:, :, CLIP:-CLIP, CLIP:-CLIP]
    ssim_n = (2 * mu_xc * mu_yc + C1) * (2 * sigma_xy + C2)
    ssim_d = (mu_xc ** 2 + mu_yc ** 2 + C1) * (sigma_x + sigma_y + C2)
    return jnp.clip(1.0 - ssim_n / ssim_d, 0.0, 2.0)


if __name__ == "__main__":
    key = jax.random.PRNGKey(0)
    k1, k2 = jax.random.split(key)
    x = jax.random.uniform(k1, (2, 4, 16, 16), dtype=jnp.float32)
    y = jax.random.uniform(k2, (2, 4, 16, 16), dtype=jnp.float32)

    out = jax.block_until_ready(ssim_pallas(x, y))
    ref = jax.block_until_ready(ssim_ref(x, y))

    assert out.shape == (2, 4, 12, 12), out.shape
    err = float(jnp.max(jnp.abs(out - ref)))
    assert err < 2e-5, err
    print("KERNEL_OK")
</pallas_src>

<mosaic_0001>
module attributes {stable_mosaic.version = 11 : i64} {
  func.func @ssim_kernel(%arg0: i32, %arg1: memref<64x128xf32, #tpu.memory_space<vmem>>, %arg2: memref<64x128xf32, #tpu.memory_space<vmem>>, %arg3: memref<64x128xf32, #tpu.memory_space<vmem>>) attributes {dimension_semantics = [#tpu.dimension_semantics<parallel>], iteration_bounds = array<i64: 2>, scalar_prefetch = 0 : i64, scratch_operands = 0 : i64, tpu.core_type = #tpu.core_type<tc>, window_params = [{transform_indices = @transform_0, window_bounds = array<i64: 64, 128>}, {transform_indices = @transform_1, window_bounds = array<i64: 64, 128>}, {transform_indices = @transform_2, window_bounds = array<i64: 64, 128>}]} {
    %c0 = arith.constant 0 : index
    %c0_0 = arith.constant 0 : index
    %0 = vector.load %arg1[%c0, %c0_0] : memref<64x128xf32, #tpu.memory_space<vmem>>, vector<64x128xf32>
    %c0_1 = arith.constant 0 : index
    %c0_2 = arith.constant 0 : index
    %1 = vector.load %arg2[%c0_1, %c0_2] : memref<64x128xf32, #tpu.memory_space<vmem>>, vector<64x128xf32>
    %c127_i32 = arith.constant 127 : i32
    %2 = tpu.dynamic_rotate %0 by %c127_i32 dim 1 : vector<64x128xf32>, i32 -> vector<64x128xf32>
    %3 = arith.addf %0, %2 : vector<64x128xf32>
    %c126_i32 = arith.constant 126 : i32
    %4 = tpu.dynamic_rotate %0 by %c126_i32 dim 1 : vector<64x128xf32>, i32 -> vector<64x128xf32>
    %5 = arith.addf %3, %4 : vector<64x128xf32>
    %c63_i32 = arith.constant 63 : i32
    %6 = tpu.dynamic_rotate %5 by %c63_i32 dim 0 : vector<64x128xf32>, i32 -> vector<64x128xf32>
    %7 = arith.addf %5, %6 : vector<64x128xf32>
    %c62_i32 = arith.constant 62 : i32
    %8 = tpu.dynamic_rotate %5 by %c62_i32 dim 0 : vector<64x128xf32>, i32 -> vector<64x128xf32>
    %9 = arith.addf %7, %8 : vector<64x128xf32>
    %c127_i32_3 = arith.constant 127 : i32
    %10 = tpu.dynamic_rotate %1 by %c127_i32_3 dim 1 : vector<64x128xf32>, i32 -> vector<64x128xf32>
    %11 = arith.addf %1, %10 : vector<64x128xf32>
    %c126_i32_4 = arith.constant 126 : i32
    %12 = tpu.dynamic_rotate %1 by %c126_i32_4 dim 1 : vector<64x128xf32>, i32 -> vector<64x128xf32>
    %13 = arith.addf %11, %12 : vector<64x128xf32>
    %c63_i32_5 = arith.constant 63 : i32
    %14 = tpu.dynamic_rotate %13 by %c63_i32_5 dim 0 : vector<64x128xf32>, i32 -> vector<64x128xf32>
    %15 = arith.addf %13, %14 : vector<64x128xf32>
    %c62_i32_6 = arith.constant 62 : i32
    %16 = tpu.dynamic_rotate %13 by %c62_i32_6 dim 0 : vector<64x128xf32>, i32 -> vector<64x128xf32>
    %17 = arith.addf %15, %16 : vector<64x128xf32>
    %c63_i32_7 = arith.constant 63 : i32
    %18 = tpu.dynamic_rotate %0 by %c63_i32_7 dim 0 : vector<64x128xf32>, i32 -> vector<64x128xf32>
    %c127_i32_8 = arith.constant 127 : i32
    %19 = tpu.dynamic_rotate %18 by %c127_i32_8 dim 1 : vector<64x128xf32>, i32 -> vector<64x128xf32>
    %c63_i32_9 = arith.constant 63 : i32
    %20 = tpu.dynamic_rotate %1 by %c63_i32_9 dim 0 : vector<64x128xf32>, i32 -> vector<64x128xf32>
    %c127_i32_10 = arith.constant 127 : i32
    %21 = tpu.dynamic_rotate %20 by %c127_i32_10 dim 1 : vector<64x128xf32>, i32 -> vector<64x128xf32>
    %cst = arith.constant 9.000000e+00 : f32
    %22 = vector.broadcast %cst : f32 to vector<64x128xf32>
    %23 = arith.mulf %22, %19 : vector<64x128xf32>
    %24 = arith.subf %23, %9 : vector<64x128xf32>
    %cst_11 = arith.constant 9.000000e+00 : f32
    %25 = vector.broadcast %cst_11 : f32 to vector<64x128xf32>
    %26 = arith.mulf %25, %21 : vector<64x128xf32>
    %27 = arith.subf %26, %17 : vector<64x128xf32>
    %28 = arith.mulf %24, %24 : vector<64x128xf32>
    %c127_i32_12 = arith.constant 127 : i32
    %29 = tpu.dynamic_rotate %28 by %c127_i32_12 dim 1 : vector<64x128xf32>, i32 -> vector<64x128xf32>
    %30 = arith.addf %28, %29 : vector<64x128xf32>
    %c126_i32_13 = arith.constant 126 : i32
    %31 = tpu.dynamic_rotate %28 by %c126_i32_13 dim 1 : vector<64x128xf32>, i32 -> vector<64x128xf32>
    %32 = arith.addf %30, %31 : vector<64x128xf32>
    %c63_i32_14 = arith.constant 63 : i32
    %33 = tpu.dynamic_rotate %32 by %c63_i32_14 dim 0 : vector<64x128xf32>, i32 -> vector<64x128xf32>
    %34 = arith.addf %32, %33 : vector<64x128xf32>
    %c62_i32_15 = arith.constant 62 : i32
    %35 = tpu.dynamic_rotate %32 by %c62_i32_15 dim 0 : vector<64x128xf32>, i32 -> vector<64x128xf32>
    %36 = arith.addf %34, %35 : vector<64x128xf32>
    %37 = arith.mulf %27, %27 : vector<64x128xf32>
    %c127_i32_16 = arith.constant 127 : i32
    %38 = tpu.dynamic_rotate %37 by %c127_i32_16 dim 1 : vector<64x128xf32>, i32 -> vector<64x128xf32>
    %39 = arith.addf %37, %38 : vector<64x128xf32>
    %c126_i32_17 = arith.constant 126 : i32
    %40 = tpu.dynamic_rotate %37 by %c126_i32_17 dim 1 : vector<64x128xf32>, i32 -> vector<64x128xf32>
    %41 = arith.addf %39, %40 : vector<64x128xf32>
    %c63_i32_18 = arith.constant 63 : i32
    %42 = tpu.dynamic_rotate %41 by %c63_i32_18 dim 0 : vector<64x128xf32>, i32 -> vector<64x128xf32>
    %43 = arith.addf %41, %42 : vector<64x128xf32>
    %c62_i32_19 = arith.constant 62 : i32
    %44 = tpu.dynamic_rotate %41 by %c62_i32_19 dim 0 : vector<64x128xf32>, i32 -> vector<64x128xf32>
    %45 = arith.addf %43, %44 : vector<64x128xf32>
    %46 = arith.mulf %24, %27 : vector<64x128xf32>
    %c127_i32_20 = arith.constant 127 : i32
    %47 = tpu.dynamic_rotate %46 by %c127_i32_20 dim 1 : vector<64x128xf32>, i32 -> vector<64x128xf32>
    %48 = arith.addf %46, %47 : vector<64x128xf32>
    %c126_i32_21 = arith.constant 126 : i32
    %49 = tpu.dynamic_rotate %46 by %c126_i32_21 dim 1 : vector<64x128xf32>, i32 -> vector<64x128xf32>
    %50 = arith.addf %48, %49 : vector<64x128xf32>
    %c63_i32_22 = arith.constant 63 : i32
    %51 = tpu.dynamic_rotate %50 by %c63_i32_22 dim 0 : vector<64x128xf32>, i32 -> vector<64x128xf32>
    %52 = arith.addf %50, %51 : vector<64x128xf32>
    %c62_i32_23 = arith.constant 62 : i32
    %53 = tpu.dynamic_rotate %50 by %c62_i32_23 dim 0 : vector<64x128xf32>, i32 -> vector<64x128xf32>
    %54 = arith.addf %52, %53 : vector<64x128xf32>
    %c63_i32_24 = arith.constant 63 : i32
    %55 = tpu.dynamic_rotate %9 by %c63_i32_24 dim 0 : vector<64x128xf32>, i32 -> vector<64x128xf32>
    %c127_i32_25 = arith.constant 127 : i32
    %56 = tpu.dynamic_rotate %55 by %c127_i32_25 dim 1 : vector<64x128xf32>, i32 -> vector<64x128xf32>
    %c63_i32_26 = arith.constant 63 : i32
    %57 = tpu.dynamic_rotate %17 by %c63_i32_26 dim 0 : vector<64x128xf32>, i32 -> vector<64x128xf32>
    %c127_i32_27 = arith.constant 127 : i32
    %58 = tpu.dynamic_rotate %57 by %c127_i32_27 dim 1 : vector<64x128xf32>, i32 -> vector<64x128xf32>
    %cst_28 = arith.constant 2.000000e+00 : f32
    %59 = vector.broadcast %cst_28 : f32 to vector<64x128xf32>
    %60 = arith.mulf %59, %56 : vector<64x128xf32>
    %61 = arith.mulf %60, %58 : vector<64x128xf32>
    %cst_29 = arith.constant 8.100000e-03 : f32
    %62 = vector.broadcast %cst_29 : f32 to vector<64x128xf32>
    %63 = arith.addf %61, %62 : vector<64x128xf32>
    %cst_30 = arith.constant 2.000000e+00 : f32
    %64 = vector.broadcast %cst_30 : f32 to vector<64x128xf32>
    %65 = arith.mulf %64, %54 : vector<64x128xf32>
    %cst_31 = arith.constant 0.656099975 : f32
    %66 = vector.broadcast %cst_31 : f32 to vector<64x128xf32>
    %67 = arith.addf %65, %66 : vector<64x128xf32>
    %68 = arith.mulf %63, %67 : vector<64x128xf32>
    %69 = arith.mulf %56, %56 : vector<64x128xf32>
    %70 = arith.mulf %58, %58 : vector<64x128xf32>
    %71 = arith.addf %69, %70 : vector<64x128xf32>
    %cst_32 = arith.constant 8.100000e-03 : f32
    %72 = vector.broadcast %cst_32 : f32 to vector<64x128xf32>
    %73 = arith.addf %71, %72 : vector<64x128xf32>
    %74 = arith.addf %36, %45 : vector<64x128xf32>
    %cst_33 = arith.constant 0.656099975 : f32
    %75 = vector.broadcast %cst_33 : f32 to vector<64x128xf32>
    %76 = arith.addf %74, %75 : vector<64x128xf32>
    %77 = arith.mulf %73, %76 : vector<64x128xf32>
    %78 = tpu.reciprocal %77 : vector<64x128xf32> -> vector<64x128xf32>
    %79 = arith.mulf %68, %78 : vector<64x128xf32>
    %cst_34 = arith.constant 1.000000e+00 : f32
    %80 = vector.broadcast %cst_34 : f32 to vector<64x128xf32>
    %81 = arith.subf %80, %79 : vector<64x128xf32>
    %cst_35 = arith.constant 0.000000e+00 : f32
    %cst_36 = arith.constant 2.000000e+00 : f32
    %82 = vector.broadcast %cst_35 : f32 to vector<64x128xf32>
    %83 = arith.maximumf %82, %81 : vector<64x128xf32>
    %84 = vector.broadcast %cst_36 : f32 to vector<64x128xf32>
    %85 = arith.minimumf %84, %83 : vector<64x128xf32>
    %c0_37 = arith.constant 0 : index
    %c0_38 = arith.constant 0 : index
    %86 = vector.load %arg3[%c0_37, %c0_38] : memref<64x128xf32, #tpu.memory_space<vmem>>, vector<64x128xf32>
    tpu.vector_store %arg3[%c0_37, %c0_38], %85 {strides = array<i32>} : memref<64x128xf32, #tpu.memory_space<vmem>>, vector<64x128xf32>,
    return
  }
  func.func @transform_0(%arg0: i32) -> (i32, i32) {
    %c0_i32 = arith.constant 0 : i32
    %c0_i32_0 = arith.constant 0 : i32
    return %arg0, %c0_i32 : i32, i32
  }
  func.func @transform_1(%arg0: i32) -> (i32, i32) {
    %c0_i32 = arith.constant 0 : i32
    %c0_i32_0 = arith.constant 0 : i32
    return %arg0, %c0_i32 : i32, i32
  }
  func.func @transform_2(%arg0: i32) -> (i32, i32) {
    %c0_i32 = arith.constant 0 : i32
    %c0_i32_0 = arith.constant 0 : i32
    return %arg0, %c0_i32 : i32, i32
  }
}

</mosaic_0001>

<llo_original>
// kernel: tpu_custom_call.1
$region0: #{tpu_custom_call.1}
  #allocation0 [shape = 'u32[]', space=smem, size = 0x4, offset = 0x4, fixed_abs, tag = 'smem constant byte address 0x4 - core index']
  #allocation1 [shape = 'u32[144,128]{1,0:T(1,128)}', space=vmem, size = 0x12000, scoped, tag = 'internal scratch']
  %s0 = inlined_call_operand.hbm [shape: f32[128,128], index: 0, kind: input, shape index: {}]
  %s1 = inlined_call_operand.hbm [shape: f32[128,128], index: 1, kind: input, shape index: {}]
  %s2 = inlined_call_operand.hbm [shape: f32[128,128], index: 2, kind: output, shape index: {}]
  %s3 = sld [smem:[#allocation0]]
  $region49: #{tpu_custom_call.1} parent=0
    _
  %s5 = ssub.s32 1, %s3
  %s6 = scalar_select 0, %s5, %s3
  $region1: #{tpu_custom_call.1} parent=0
    #allocation2 [shape = 'u8[65536]{0}', space=vmem, size = 0x10000, scoped, tag = 'input window, operand 0']
    #allocation3 [shape = 's32[2]{0}', space=sflag, size = 0x8, scoped, tag = 'scoped memory for tpu_custom_call.1']
    #allocation4 [shape = 's32[2]{0}', space=sflag, size = 0x8, scoped, tag = 'scoped memory for tpu_custom_call.1']
    #allocation5 [shape = 'u8[65536]{0}', space=vmem, size = 0x10000, scoped, tag = 'input window, operand 1']
    #allocation6 [shape = 's32[2]{0}', space=sflag, size = 0x8, scoped, tag = 'scoped memory for tpu_custom_call.1']
    #allocation7 [shape = 'u8[65536]{0}', space=vmem, size = 0x10000, scoped, tag = 'output window, operand 0']
    %7 = vsyncpa [#allocation3], 0
    %s8 = scalar_lea.sflag [#allocation3], 1
    %9 = vsyncpa %s8, 0
    %10 = vsyncpa [#allocation6], 0
    %s11 = scalar_lea.sflag [#allocation6], 1
    %12 = vsyncpa %s11, 0
    %13 = vsyncpa [#allocation4], 0
    %s14 = scalar_lea.sflag [#allocation4], 1
    %15 = vsyncpa %s14, 0
    loop: start=0, step=1, limit=4
    $region2: #{tpu_custom_call.1} parent=1 // loop_pre_header
      _
    $region3: #{tpu_custom_call.1} parent=1 // loop_header
      %s17 = sphi 0, %s21
      %p18 = scmp.ge.s32.totalorder %s17, 4
      %s27 = sphi 0, %s29
      %s30 = sphi 0, %s27
      %s31 = sphi 0, %s30
      %s47 = sphi 0, %s31
      %s53 = sphi 0, %s55
      %s56 = sphi 0, %s53
      %s57 = sphi 0, %s56
      %s73 = sphi 0, %s57
      %s79 = sphi 0, %s81
      %s82 = sphi 0, %s79
      %s83 = sphi 0, %s82
      %s99 = sphi 0, %s83
    $region4: #{tpu_custom_call.1} parent=1 // loop_header_branch
      %20 = sbr.rel (%p18) target = $region8
    $region5: #{tpu_custom_call.1} parent=1 // loop_body
      %s22 = ssub.s32 %s17, 1
      %s23 = ssub.s32 %s17, 2
      %s24 = sadd.s32 %s17, 1
      %s25 = ssub.s32 %s17, %s24
      %p26 = scmp.eq.s32.totalorder %s25, 0
      %s28 = sadd.s32 %s27, 1
      %s29 = scalar_select %p26, %s27, %s28
      %p32 = pneg %p26
      %p33 = scmp.eq.s32.totalorder %s17, 1
      %p34 = por %p32, %p33
      %p35 = scmp.ne.s32.totalorder %s27, %s30
      %p36 = scmp.eq.s32.totalorder %s17, 0
      %p37 = por %p35, %p36
      %p38 = scmp.ne.s32.totalorder %s27, %s30
      %p39 = scmp.eq.s32.totalorder %s22, 1
      %p40 = por %p38, %p39
      %p41 = scmp.ne.s32.totalorder %s30, %s31
      %p42 = scmp.eq.s32.totalorder %s22, 0
      %p43 = por %p41, %p42
      %p44 = scmp.ne.s32.totalorder %s30, %s31
      %p45 = scmp.eq.s32.totalorder %s23, 1
      %p46 = por %p44, %p45
      %p48 = scmp.ne.s32.totalorder %s31, %s47
      %p49 = scmp.eq.s32.totalorder %s23, 0
      %p50 = por %p48, %p49
      %s51 = ssub.s32 %s17, %s24
      %p52 = scmp.eq.s32.totalorder %s51, 0
      %s54 = sadd.s32 %s53, 1
      %s55 = scalar_select %p52, %s53, %s54
      %p58 = pneg %p52
      %p59 = scmp.eq.s32.totalorder %s17, 1
      %p60 = por %p58, %p59
      %p61 = scmp.ne.s32.totalorder %s53, %s56
      %p62 = scmp.eq.s32.totalorder %s17, 0
      %p63 = por %p61, %p62
      %p64 = scmp.ne.s32.totalorder %s53, %s56
      %p65 = scmp.eq.s32.totalorder %s22, 1
      %p66 = por %p64, %p65
      %p67 = scmp.ne.s32.totalorder %s56, %s57
      %p68 = scmp.eq.s32.totalorder %s22, 0
      %p69 = por %p67, %p68
      %p70 = scmp.ne.s32.totalorder %s56, %s57
      %p71 = scmp.eq.s32.totalorder %s23, 1
      %p72 = por %p70, %p71
      %p74 = scmp.ne.s32.totalorder %s57, %s73
      %p75 = scmp.eq.s32.totalorder %s23, 0
      %p76 = por %p74, %p75
      %s77 = ssub.s32 %s17, %s24
      %p78 = scmp.eq.s32.totalorder %s77, 0
      %s80 = sadd.s32 %s79, 1
      %s81 = scalar_select %p78, %s79, %s80
      %p84 = pneg %p78
      %p85 = scmp.eq.s32.totalorder %s17, 1
      %p86 = por %p84, %p85
      %p87 = scmp.ne.s32.totalorder %s79, %s82
      %p88 = scmp.eq.s32.totalorder %s17, 0
      %p89 = por %p87, %p88
      %p90 = scmp.ne.s32.totalorder %s79, %s82
      %p91 = scmp.eq.s32.totalorder %s22, 1
      %p92 = por %p90, %p91
      %p93 = scmp.ne.s32.totalorder %s82, %s83
      %p94 = scmp.eq.s32.totalorder %s22, 0
      %p95 = por %p93, %p94
      %p96 = scmp.ne.s32.totalorder %s82, %s83
      %p97 = scmp.eq.s32.totalorder %s23, 1
      %p98 = por %p96, %p97
      %p100 = scmp.ne.s32.totalorder %s83, %s99
      %p101 = scmp.eq.s32.totalorder %s23, 0
      %p102 = por %p100, %p101
      %p103 = scmp.le.s32.totalorder 1, %s17
      %p104 = scmp.lt.s32.totalorder %s17, 3
      %p105 = pnand %p103, %p104
      %p106 = pneg %p105
      // Predicated region
      $region9: #{tpu_custom_call.1} parent=5 // pred_check
        _
      $region10: #{tpu_custom_call.1} parent=5 // pred_check_branch
        %108 = sbr.rel (%p105) target = $region12
      $region11: #{tpu_custom_call.1} parent=5 // pred_region
        %s109 = ssub.s32 %s17, 1
      $region12: #{tpu_custom_call.1} parent=5 // pred_fallthru
        _
      %p110 = scmp.lt.s32.totalorder %s17, 2
      // Predicated region
      $region13: #{tpu_custom_call.1} parent=5 // pred_check
        %p111 = pneg %p110
      $region14: #{tpu_custom_call.1} parent=5 // pred_check_branch
        %113 = sbr.rel (%p111) target = $region16
      $region15: #{tpu_custom_call.1} parent=5 // pred_region
        // Predicated region
        $region17: #{tpu_custom_call.1} parent=15 // pred_check
          %p114 = pneg %p37
        $region18: #{tpu_custom_call.1} parent=15 // pred_check_branch
          %116 = sbr.rel (%p114) target = $region20
        $region19: #{tpu_custom_call.1} parent=15 // pred_region
          %s117 = sand.u32 %s27, 1
          %s118 = scalar_lea.sflag [#allocation3], %s117
          %s119 = sand.u32 %s27, 1
          %s120 = smul.addr %s119, 64
          %s121 = scalar_lea.vmem [#allocation2], %s120
          %s122 = smul.u32 8, %s17
          %s124 = ssub.s32 1024, 1024
          %125 = vsyncadd %s118, %s124
          %s126 = smul.addr %s122, 128
          %s127 = scalar_lea.hbm %s0, %s126
          %s128 = sshll.u32 %s121, 4
          %s129 = int_to_ptr.vmem [resolvable:$true] %s128
          %134 = dma.hbm_to_vmem [thread:$0]  %s127, 1024, %s129, %s118, 128, 128, 8
        $region20: #{tpu_custom_call.1} parent=15 // pred_fallthru
          _
        // Predicated region
        $region21: #{tpu_custom_call.1} parent=15 // pred_check
          %p135 = pneg %p63
        $region22: #{tpu_custom_call.1} parent=15 // pred_check_branch
          %137 = sbr.rel (%p135) target = $region24
        $region23: #{tpu_custom_call.1} parent=15 // pred_region
          %s138 = sand.u32 %s53, 1
          %s139 = scalar_lea.sflag [#allocation6], %s138
          %s140 = sand.u32 %s53, 1
          %s141 = smul.addr %s140, 64
          %s142 = scalar_lea.vmem [#allocation5], %s141
          %s143 = smul.u32 8, %s17
          %s145 = ssub.s32 1024, 1024
          %146 = vsyncadd %s139, %s145
          %s147 = smul.addr %s143, 128
          %s148 = scalar_lea.hbm %s1, %s147
          %s149 = sshll.u32 %s142, 4
          %s150 = int_to_ptr.vmem [resolvable:$true] %s149
          %155 = dma.hbm_to_vmem [thread:$0]  %s148, 1024, %s150, %s139, 128, 128, 8
        $region24: #{tpu_custom_call.1} parent=15 // pred_fallthru
          _
      $region16: #{tpu_custom_call.1} parent=5 // pred_fallthru
        _
      %p156 = scmp.le.s32.totalorder 1, %s17
      %p157 = scmp.lt.s32.totalorder %s17, 3
      %p158 = pnand %p156, %p157
      %p159 = pneg %p158
      // Predicated region
      $region25: #{tpu_custom_call.1} parent=5 // pred_check
        _
      $region26: #{tpu_custom_call.1} parent=5 // pred_check_branch
        %161 = sbr.rel (%p158) target = $region28
      $region27: #{tpu_custom_call.1} parent=5 // pred_region
        %s162 = ssub.s32 %s17, 1
        %s163 = sand.u32 %s30, 1
        %s164 = scalar_lea.sflag [#allocation3], %s163
        %s165 = sand.u32 %s30, 1
        %s166 = smul.addr %s165, 64
        %s167 = scalar_lea.vmem [#allocation2], %s166
        // Predicated region
        $region29: #{tpu_custom_call.1} parent=27 // pred_check
          %p168 = pneg %p43
        $region30: #{tpu_custom_call.1} parent=27 // pred_check_branch
          %170 = sbr.rel (%p168) target = $region32
        $region31: #{tpu_custom_call.1} parent=27 // pred_region
          %171 = dma.done %s164, 1024
        $region32: #{tpu_custom_call.1} parent=27 // pred_fallthru
          _
        %s172 = sand.u32 %s56, 1
        %s173 = scalar_lea.sflag [#allocation6], %s172
        %s174 = sand.u32 %s56, 1
        %s175 = smul.addr %s174, 64
        %s176 = scalar_lea.vmem [#allocation5], %s175
        // Predicated region
        $region33: #{tpu_custom_call.1} parent=27 // pred_check
          %p177 = pneg %p69
        $region34: #{tpu_custom_call.1} parent=27 // pred_check_branch
          %179 = sbr.rel (%p177) target = $region36
        $region35: #{tpu_custom_call.1} parent=27 // pred_region
          %180 = dma.done %s173, 1024
        $region36: #{tpu_custom_call.1} parent=27 // pred_fallthru
          _
        %s181 = sand.u32 %s30, 1
        %s182 = scalar_lea.sflag [#allocation3], %s181
        %s183 = sand.u32 %s30, 1
        %s184 = smul.addr %s183, 64
        %s185 = scalar_lea.vmem [#allocation2], %s184
        %p186 = pneg %p43
        %p187 = pneg %p40
        %s188 = sand.u32 %s56, 1
        %s189 = scalar_lea.sflag [#allocation6], %s188
        %s190 = sand.u32 %s56, 1
        %s191 = smul.addr %s190, 64
        %s192 = scalar_lea.vmem [#allocation5], %s191
        %p193 = pneg %p69
        %p194 = pneg %p66
        %p195 = pneg %p95
        %p196 = pneg %p92
        %s197 = sand.u32 %s82, 1
        %s198 = scalar_lea.sflag [#allocation4], %s197
        %s199 = sand.u32 %s82, 1
        %s200 = smul.addr %s199, 64
        %s201 = scalar_lea.vmem [#allocation7], %s200
        %s202 = smul.u32 8, %s22
        %s203 = smul.u32 8, %s22
        %s204 = smul.u32 8, %s22
        %v205 = vld [vmem:[%s167] sm:$0xff]
        %v206 = vld [vmem:[%s167 + $0x8] sm:$0xff]
        %v207 = vld [vmem:[%s167 + $0x10] sm:$0xff]
        %v208 = vld [vmem:[%s167 + $0x18] sm:$0xff]
        %v209 = vld [vmem:[%s167 + $0x20] sm:$0xff]
        %v210 = vld [vmem:[%s167 + $0x28] sm:$0xff]
        %v211 = vld [vmem:[%s167 + $0x30] sm:$0xff]
        %v212 = vld [vmem:[%s167 + $0x38] sm:$0xff]
        %v213 = vld [vmem:[%s176] sm:$0xff]
        %v214 = vld [vmem:[%s176 + $0x8] sm:$0xff]
        %v215 = vld [vmem:[%s176 + $0x10] sm:$0xff]
        %v216 = vld [vmem:[%s176 + $0x18] sm:$0xff]
        %v217 = vld [vmem:[%s176 + $0x20] sm:$0xff]
        %v218 = vld [vmem:[%s176 + $0x28] sm:$0xff]
        %v219 = vld [vmem:[%s176 + $0x30] sm:$0xff]
        %v220 = vld [vmem:[%s176 + $0x38] sm:$0xff]
        %221 = vrot.lane.b32.xlu0 %v205, 127
        %v222 = vpop.permute.xlu0 %221
        %223 = vrot.lane.b32.xlu0 %v206, 127
        %v224 = vpop.permute.xlu0 %223
        %225 = vrot.lane.b32.xlu0 %v207, 127
        %v226 = vpop.permute.xlu0 %225
        %227 = vrot.lane.b32.xlu0 %v208, 127
        %v228 = vpop.permute.xlu0 %227
        %229 = vrot.lane.b32.xlu0 %v209, 127
        %v230 = vpop.permute.xlu0 %229
        %231 = vrot.lane.b32.xlu0 %v210, 127
        %v232 = vpop.permute.xlu0 %231
        %233 = vrot.lane.b32.xlu0 %v211, 127
        %v234 = vpop.permute.xlu0 %233
        %235 = vrot.lane.b32.xlu0 %v212, 127
        %v236 = vpop.permute.xlu0 %235
        %v237 = vadd.f32 %v205, %v222
        %v238 = vadd.f32 %v206, %v224
        %v239 = vadd.f32 %v207, %v226
        %v240 = vadd.f32 %v208, %v228
        %v241 = vadd.f32 %v209, %v230
        %v242 = vadd.f32 %v210, %v232
        %v243 = vadd.f32 %v211, %v234
        %v244 = vadd.f32 %v212, %v236
        %245 = vrot.lane.b32.xlu0 %v205, 126
        %v246 = vpop.permute.xlu0 %245
        %247 = vrot.lane.b32.xlu0 %v206, 126
        %v248 = vpop.permute.xlu0 %247
        %249 = vrot.lane.b32.xlu0 %v207, 126
        %v250 = vpop.permute.xlu0 %249
        %251 = vrot.lane.b32.xlu0 %v208, 126
        %v252 = vpop.permute.xlu0 %251
        %253 = vrot.lane.b32.xlu0 %v209, 126
        %v254 = vpop.permute.xlu0 %253
        %255 = vrot.lane.b32.xlu0 %v210, 126
        %v256 = vpop.permute.xlu0 %255
        %257 = vrot.lane.b32.xlu0 %v211, 126
        %v258 = vpop.permute.xlu0 %257
        %259 = vrot.lane.b32.xlu0 %v212, 126
        %v260 = vpop.permute.xlu0 %259
        %v261 = vadd.f32 %v237, %v246
        %v262 = vadd.f32 %v238, %v248
        %v263 = vadd.f32 %v239, %v250
        %v264 = vadd.f32 %v240, %v252
        %v265 = vadd.f32 %v241, %v254
        %v266 = vadd.f32 %v242, %v256
        %v267 = vadd.f32 %v243, %v258
        %v268 = vadd.f32 %v244, %v260
        %v269 = vrot.slane %v261, 1
        %v270 = vrot.slane %v262, 1
        %v271 = vrot.slane %v263, 1
        %v272 = vrot.slane %v264, 1
        %v273 = vrot.slane %v265, 1
        %v274 = vrot.slane %v266, 1
        %v275 = vrot.slane %v267, 1
        %v276 = vrot.slane %v268, 1
        %v277 = vlaneseq
        %v278 = vshrl.u32 %v277, 7
        %vm279 = vcmp.lt.s32.totalorder %v278, 7
        %v280 = vsel %vm279, %v275, %v276
        %v281 = vsel %vm279, %v274, %v275
        %v282 = vsel %vm279, %v273, %v274
        %v283 = vsel %vm279, %v272, %v273
        %v284 = vsel %vm279, %v271, %v272
        %v285 = vsel %vm279, %v270, %v271
        %v286 = vsel %vm279, %v269, %v270
        %v287 = vsel %vm279, %v276, %v269
        %v288 = vadd.f32 %v261, %v286
        %v289 = vadd.f32 %v262, %v285
        %v290 = vadd.f32 %v263, %v284
        %v291 = vadd.f32 %v264, %v283
        %v292 = vadd.f32 %v265, %v282
        %v293 = vadd.f32 %v266, %v281
        %v294 = vadd.f32 %v267, %v280
        %v295 = vadd.f32 %v268, %v287
        %v296 = vrot.slane %v261, 2
        %v297 = vrot.slane %v262, 2
        %v298 = vrot.slane %v263, 2
        %v299 = vrot.slane %v264, 2
        %v300 = vrot.slane %v265, 2
        %v301 = vrot.slane %v266, 2
        %v302 = vrot.slane %v267, 2
        %v303 = vrot.slane %v268, 2
        %vm304 = vcmp.lt.s32.totalorder %v278, 6
        %v305 = vsel %vm304, %v302, %v303
        %v306 = vsel %vm304, %v301, %v302
        %v307 = vsel %vm304, %v300, %v301
        %v308 = vsel %vm304, %v299, %v300
        %v309 = vsel %vm304, %v298, %v299
        %v310 = vsel %vm304, %v297, %v298
        %v311 = vsel %vm304, %v296, %v297
        %v312 = vsel %vm304, %v303, %v296
        %v313 = vadd.f32 %v288, %v311
        %v314 = vadd.f32 %v289, %v310
        %v315 = vadd.f32 %v290, %v309
        %v316 = vadd.f32 %v291, %v308
        %v317 = vadd.f32 %v292, %v307
        %v318 = vadd.f32 %v293, %v306
        %v319 = vadd.f32 %v294, %v305
        %v320 = vadd.f32 %v295, %v312
        %321 = vrot.lane.b32.xlu0 %v213, 127
        %v322 = vpop.permute.xlu0 %321
        %323 = vrot.lane.b32.xlu0 %v214, 127
        %v324 = vpop.permute.xlu0 %323
        %325 = vrot.lane.b32.xlu0 %v215, 127
        %v326 = vpop.permute.xlu0 %325
        %327 = vrot.lane.b32.xlu0 %v216, 127
        %v328 = vpop.permute.xlu0 %327
        %329 = vrot.lane.b32.xlu0 %v217, 127
        %v330 = vpop.permute.xlu0 %329
        %331 = vrot.lane.b32.xlu0 %v218, 127
        %v332 = vpop.permute.xlu0 %331
        %333 = vrot.lane.b32.xlu0 %v219, 127
        %v334 = vpop.permute.xlu0 %333
        %335 = vrot.lane.b32.xlu0 %v220, 127
        %v336 = vpop.permute.xlu0 %335
        %v337 = vadd.f32 %v213, %v322
        %v338 = vadd.f32 %v214, %v324
        %v339 = vadd.f32 %v215, %v326
        %v340 = vadd.f32 %v216, %v328
        %v341 = vadd.f32 %v217, %v330
        %v342 = vadd.f32 %v218, %v332
        %v343 = vadd.f32 %v219, %v334
        %v344 = vadd.f32 %v220, %v336
        %345 = vrot.lane.b32.xlu0 %v213, 126
        %v346 = vpop.permute.xlu0 %345
        %347 = vrot.lane.b32.xlu0 %v214, 126
        %v348 = vpop.permute.xlu0 %347
        %349 = vrot.lane.b32.xlu0 %v215, 126
        %v350 = vpop.permute.xlu0 %349
        %351 = vrot.lane.b32.xlu0 %v216, 126
        %v352 = vpop.permute.xlu0 %351
        %353 = vrot.lane.b32.xlu0 %v217, 126
        %v354 = vpop.permute.xlu0 %353
        %355 = vrot.lane.b32.xlu0 %v218, 126
        %v356 = vpop.permute.xlu0 %355
        %357 = vrot.lane.b32.xlu0 %v219, 126
        %v358 = vpop.permute.xlu0 %357
        %359 = vrot.lane.b32.xlu0 %v220, 126
        %v360 = vpop.permute.xlu0 %359
        %v361 = vadd.f32 %v337, %v346
        %v362 = vadd.f32 %v338, %v348
        %v363 = vadd.f32 %v339, %v350
        %v364 = vadd.f32 %v340, %v352
        %v365 = vadd.f32 %v341, %v354
        %v366 = vadd.f32 %v342, %v356
        %v367 = vadd.f32 %v343, %v358
        %v368 = vadd.f32 %v344, %v360
        %v369 = vrot.slane %v361, 1
        %v370 = vrot.slane %v362, 1
        %v371 = vrot.slane %v363, 1
        %v372 = vrot.slane %v364, 1
        %v373 = vrot.slane %v365, 1
        %v374 = vrot.slane %v366, 1
        %v375 = vrot.slane %v367, 1
        %v376 = vrot.slane %v368, 1
        %v377 = vsel %vm279, %v375, %v376
        %v378 = vsel %vm279, %v374, %v375
        %v379 = vsel %vm279, %v373, %v374
        %v380 = vsel %vm279, %v372, %v373
        %v381 = vsel %vm279, %v371, %v372
        %v382 = vsel %vm279, %v370, %v371
        %v383 = vsel %vm279, %v369, %v370
        %v384 = vsel %vm279, %v376, %v369
        %v385 = vadd.f32 %v361, %v383
        %v386 = vadd.f32 %v362, %v382
        %v387 = vadd.f32 %v363, %v381
        %v388 = vadd.f32 %v364, %v380
        %v389 = vadd.f32 %v365, %v379
        %v390 = vadd.f32 %v366, %v378
        %v391 = vadd.f32 %v367, %v377
        %v392 = vadd.f32 %v368, %v384
        %v393 = vrot.slane %v361, 2
        %v394 = vrot.slane %v362, 2
        %v395 = vrot.slane %v363, 2
        %v396 = vrot.slane %v364, 2
        %v397 = vrot.slane %v365, 2
        %v398 = vrot.slane %v366, 2
        %v399 = vrot.slane %v367, 2
        %v400 = vrot.slane %v368, 2
        %v401 = vsel %vm304, %v399, %v400
        %v402 = vsel %vm304, %v398, %v399
        %v403 = vsel %vm304, %v397, %v398
        %v404 = vsel %vm304, %v396, %v397
        %v405 = vsel %vm304, %v395, %v396
        %v406 = vsel %vm304, %v394, %v395
        %v407 = vsel %vm304, %v393, %v394
        %v408 = vsel %vm304, %v400, %v393
        %v409 = vadd.f32 %v385, %v407
        %v410 = vadd.f32 %v386, %v406
        %v411 = vadd.f32 %v387, %v405
        %v412 = vadd.f32 %v388, %v404
        %v413 = vadd.f32 %v389, %v403
        %v414 = vadd.f32 %v390, %v402
        %v415 = vadd.f32 %v391, %v401
        %v416 = vadd.f32 %v392, %v408
        %v417 = vrot.slane %v205, 1
        %v418 = vrot.slane %v206, 1
        %v419 = vrot.slane %v207, 1
        %v420 = vrot.slane %v208, 1
        %v421 = vrot.slane %v209, 1
        %v422 = vrot.slane %v210, 1
        %v423 = vrot.slane %v211, 1
        %v424 = vrot.slane %v212, 1
        %v425 = vsel %vm279, %v423, %v424
        %v426 = vsel %vm279, %v422, %v423
        %v427 = vsel %vm279, %v421, %v422
        %v428 = vsel %vm279, %v420, %v421
        %v429 = vsel %vm279, %v419, %v420
        %v430 = vsel %vm279, %v418, %v419
        %v431 = vsel %vm279, %v417, %v418
        %v432 = vsel %vm279, %v424, %v417
        %433 = vrot.lane.b32.xlu0 %v431, 127
        %v434 = vpop.permute.xlu0 %433
        %435 = vrot.lane.b32.xlu0 %v430, 127
        %v436 = vpop.permute.xlu0 %435
        %437 = vrot.lane.b32.xlu0 %v429, 127
        %v438 = vpop.permute.xlu0 %437
        %439 = vrot.lane.b32.xlu0 %v428, 127
        %v440 = vpop.permute.xlu0 %439
        %441 = vrot.lane.b32.xlu0 %v427, 127
        %v442 = vpop.permute.xlu0 %441
        %443 = vrot.lane.b32.xlu0 %v426, 127
        %v444 = vpop.permute.xlu0 %443
        %445 = vrot.lane.b32.xlu0 %v425, 127
        %v446 = vpop.permute.xlu0 %445
        %447 = vrot.lane.b32.xlu0 %v432, 127
        %v448 = vpop.permute.xlu0 %447
        %v449 = vrot.slane %v213, 1
        %v450 = vrot.slane %v214, 1
        %v451 = vrot.slane %v215, 1
        %v452 = vrot.slane %v216, 1
        %v453 = vrot.slane %v217, 1
        %v454 = vrot.slane %v218, 1
        %v455 = vrot.slane %v219, 1
        %v456 = vrot.slane %v220, 1
        %v457 = vsel %vm279, %v455, %v456
        %v458 = vsel %vm279, %v454, %v455
        %v459 = vsel %vm279, %v453, %v454
        %v460 = vsel %vm279, %v452, %v453
        %v461 = vsel %vm279, %v451, %v452
        %v462 = vsel %vm279, %v450, %v451
        %v463 = vsel %vm279, %v449, %v450
        %v464 = vsel %vm279, %v456, %v449
        %465 = vrot.lane.b32.xlu0 %v463, 127
        %v466 = vpop.permute.xlu0 %465
        %467 = vrot.lane.b32.xlu0 %v462, 127
        %v468 = vpop.permute.xlu0 %467
        %469 = vrot.lane.b32.xlu0 %v461, 127
        %v470 = vpop.permute.xlu0 %469
        %471 = vrot.lane.b32.xlu0 %v460, 127
        %v472 = vpop.permute.xlu0 %471
        %473 = vrot.lane.b32.xlu0 %v459, 127
        %v474 = vpop.permute.xlu0 %473
        %475 = vrot.lane.b32.xlu0 %v458, 127
        %v476 = vpop.permute.xlu0 %475
        %477 = vrot.lane.b32.xlu0 %v457, 127
        %v478 = vpop.permute.xlu0 %477
        %479 = vrot.lane.b32.xlu0 %v464, 127
        %v480 = vpop.permute.xlu0 %479
        %v481 = vmul.f32 %v434, 9.0
        %v482 = vmul.f32 %v436, 9.0
        %v483 = vmul.f32 %v438, 9.0
        %v484 = vmul.f32 %v440, 9.0
        %v485 = vmul.f32 %v442, 9.0
        %v486 = vmul.f32 %v444, 9.0
        %v487 = vmul.f32 %v446, 9.0
        %v488 = vmul.f32 %v448, 9.0
        %v489 = vsub.f32 %v481, %v313
        %v490 = vsub.f32 %v482, %v314
        %v491 = vsub.f32 %v483, %v315
        %v492 = vsub.f32 %v484, %v316
        %v493 = vsub.f32 %v485, %v317
        %v494 = vsub.f32 %v486, %v318
        %v495 = vsub.f32 %v487, %v319
        %v496 = vsub.f32 %v488, %v320
        %v497 = vmul.f32 %v466, 9.0
        %v498 = vmul.f32 %v468, 9.0
        %v499 = vmul.f32 %v470, 9.0
        %v500 = vmul.f32 %v472, 9.0
        %v501 = vmul.f32 %v474, 9.0
        %v502 = vmul.f32 %v476, 9.0
        %v503 = vmul.f32 %v478, 9.0
        %v504 = vmul.f32 %v480, 9.0
        %v505 = vsub.f32 %v497, %v409
        %v506 = vsub.f32 %v498, %v410
        %v507 = vsub.f32 %v499, %v411
        %v508 = vsub.f32 %v500, %v412
        %v509 = vsub.f32 %v501, %v413
        %v510 = vsub.f32 %v502, %v414
        %v511 = vsub.f32 %v503, %v415
        %v512 = vsub.f32 %v504, %v416
        %v513 = vmul.f32 %v489, %v489
        %v514 = vmul.f32 %v490, %v490
        %v515 = vmul.f32 %v491, %v491
        %v516 = vmul.f32 %v492, %v492
        %v517 = vmul.f32 %v493, %v493
        %v518 = vmul.f32 %v494, %v494
        %v519 = vmul.f32 %v495, %v495
        %v520 = vmul.f32 %v496, %v496
        %521 = vrot.lane.b32.xlu0 %v513, 127
        %v522 = vpop.permute.xlu0 %521
        %523 = vrot.lane.b32.xlu0 %v514, 127
        %v524 = vpop.permute.xlu0 %523
        %525 = vrot.lane.b32.xlu0 %v515, 127
        %v526 = vpop.permute.xlu0 %525
        %527 = vrot.lane.b32.xlu0 %v516, 127
        %v528 = vpop.permute.xlu0 %527
        %529 = vrot.lane.b32.xlu0 %v517, 127
        %v530 = vpop.permute.xlu0 %529
        %531 = vrot.lane.b32.xlu0 %v518, 127
        %v532 = vpop.permute.xlu0 %531
        %533 = vrot.lane.b32.xlu0 %v519, 127
        %v534 = vpop.permute.xlu0 %533
        %535 = vrot.lane.b32.xlu0 %v520, 127
        %v536 = vpop.permute.xlu0 %535
        %v537 = vadd.f32 %v513, %v522
        %v538 = vadd.f32 %v514, %v524
        %v539 = vadd.f32 %v515, %v526
        %v540 = vadd.f32 %v516, %v528
        %v541 = vadd.f32 %v517, %v530
        %v542 = vadd.f32 %v518, %v532
        %v543 = vadd.f32 %v519, %v534
        %v544 = vadd.f32 %v520, %v536
        %545 = vrot.lane.b32.xlu0 %v513, 126
        %v546 = vpop.permute.xlu0 %545
        %547 = vrot.lane.b32.xlu0 %v514, 126
        %v548 = vpop.permute.xlu0 %547
        %549 = vrot.lane.b32.xlu0 %v515, 126
        %v550 = vpop.permute.xlu0 %549
        %551 = vrot.lane.b32.xlu0 %v516, 126
        %v552 = vpop.permute.xlu0 %551
        %553 = vrot.lane.b32.xlu0 %v517, 126
        %v554 = vpop.permute.xlu0 %553
        %555 = vrot.lane.b32.xlu0 %v518, 126
        %v556 = vpop.permute.xlu0 %555
        %557 = vrot.lane.b32.xlu0 %v519, 126
        %v558 = vpop.permute.xlu0 %557
        %559 = vrot.lane.b32.xlu0 %v520, 126
        %v560 = vpop.permute.xlu0 %559
        %v561 = vadd.f32 %v537, %v546
        %v562 = vadd.f32 %v538, %v548
        %v563 = vadd.f32 %v539, %v550
        %v564 = vadd.f32 %v540, %v552
        %v565 = vadd.f32 %v541, %v554
        %v566 = vadd.f32 %v542, %v556
        %v567 = vadd.f32 %v543, %v558
        %v568 = vadd.f32 %v544, %v560
        %v569 = vrot.slane %v561, 1
        %v570 = vrot.slane %v562, 1
        %v571 = vrot.slane %v563, 1
        %v572 = vrot.slane %v564, 1
        %v573 = vrot.slane %v565, 1
        %v574 = vrot.slane %v566, 1
        %v575 = vrot.slane %v567, 1
        %v576 = vrot.slane %v568, 1
        %v577 = vsel %vm279, %v575, %v576
        %v578 = vsel %vm279, %v574, %v575
        %v579 = vsel %vm279, %v573, %v574
        %v580 = vsel %vm279, %v572, %v573
        %v581 = vsel %vm279, %v571, %v572
        %v582 = vsel %vm279, %v570, %v571
        %v583 = vsel %vm279, %v569, %v570
        %v584 = vsel %vm279, %v576, %v569
        %v585 = vadd.f32 %v561, %v583
        %v586 = vadd.f32 %v562, %v582
        %v587 = vadd.f32 %v563, %v581
        %v588 = vadd.f32 %v564, %v580
        %v589 = vadd.f32 %v565, %v579
        %v590 = vadd.f32 %v566, %v578
        %v591 = vadd.f32 %v567, %v577
        %v592 = vadd.f32 %v568, %v584
        %v593 = vrot.slane %v561, 2
        %v594 = vrot.slane %v562, 2
        %v595 = vrot.slane %v563, 2
        %v596 = vrot.slane %v564, 2
        %v597 = vrot.slane %v565, 2
        %v598 = vrot.slane %v566, 2
        %v599 = vrot.slane %v567, 2
        %v600 = vrot.slane %v568, 2
        %v601 = vsel %vm304, %v599, %v600
        %v602 = vsel %vm304, %v598, %v599
        %v603 = vsel %vm304, %v597, %v598
        %v604 = vsel %vm304, %v596, %v597
        %v605 = vsel %vm304, %v595, %v596
        %v606 = vsel %vm304, %v594, %v595
        %v607 = vsel %vm304, %v593, %v594
        %v608 = vsel %vm304, %v600, %v593
        %v609 = vadd.f32 %v585, %v607
        %v610 = vadd.f32 %v586, %v606
        %v611 = vadd.f32 %v587, %v605
        %v612 = vadd.f32 %v588, %v604
        %v613 = vadd.f32 %v589, %v603
        %v614 = vadd.f32 %v590, %v602
        %v615 = vadd.f32 %v591, %v601
        %v616 = vadd.f32 %v592, %v608
        %v617 = vmul.f32 %v505, %v505
        %v618 = vmul.f32 %v506, %v506
        %v619 = vmul.f32 %v507, %v507
        %v620 = vmul.f32 %v508, %v508
        %v621 = vmul.f32 %v509, %v509
        %v622 = vmul.f32 %v510, %v510
        %v623 = vmul.f32 %v511, %v511
        %v624 = vmul.f32 %v512, %v512
        %625 = vrot.lane.b32.xlu0 %v617, 127
        %v626 = vpop.permute.xlu0 %625
        %627 = vrot.lane.b32.xlu0 %v618, 127
        %v628 = vpop.permute.xlu0 %627
        %629 = vrot.lane.b32.xlu0 %v619, 127
        %v630 = vpop.permute.xlu0 %629
        %631 = vrot.lane.b32.xlu0 %v620, 127
        %v632 = vpop.permute.xlu0 %631
        %633 = vrot.lane.b32.xlu0 %v621, 127
        %v634 = vpop.permute.xlu0 %633
        %635 = vrot.lane.b32.xlu0 %v622, 127
        %v636 = vpop.permute.xlu0 %635
        %637 = vrot.lane.b32.xlu0 %v623, 127
        %v638 = vpop.permute.xlu0 %637
        %639 = vrot.lane.b32.xlu0 %v624, 127
        %v640 = vpop.permute.xlu0 %639
        %v641 = vadd.f32 %v617, %v626
        %v642 = vadd.f32 %v618, %v628
        %v643 = vadd.f32 %v619, %v630
        %v644 = vadd.f32 %v620, %v632
        %v645 = vadd.f32 %v621, %v634
        %v646 = vadd.f32 %v622, %v636
        %v647 = vadd.f32 %v623, %v638
        %v648 = vadd.f32 %v624, %v640
        %649 = vrot.lane.b32.xlu0 %v617, 126
        %v650 = vpop.permute.xlu0 %649
        %651 = vrot.lane.b32.xlu0 %v618, 126
        %v652 = vpop.permute.xlu0 %651
        %653 = vrot.lane.b32.xlu0 %v619, 126
        %v654 = vpop.permute.xlu0 %653
        %655 = vrot.lane.b32.xlu0 %v620, 126
        %v656 = vpop.permute.xlu0 %655
        %657 = vrot.lane.b32.xlu0 %v621, 126
        %v658 = vpop.permute.xlu0 %657
        %659 = vrot.lane.b32.xlu0 %v622, 126
        %v660 = vpop.permute.xlu0 %659
        %661 = vrot.lane.b32.xlu0 %v623, 126
        %v662 = vpop.permute.xlu0 %661
        %663 = vrot.lane.b32.xlu0 %v624, 126
        %v664 = vpop.permute.xlu0 %663
        %v665 = vadd.f32 %v641, %v650
        %v666 = vadd.f32 %v642, %v652
        %v667 = vadd.f32 %v643, %v654
        %v668 = vadd.f32 %v644, %v656
        %v669 = vadd.f32 %v645, %v658
        %v670 = vadd.f32 %v646, %v660
        %v671 = vadd.f32 %v647, %v662
        %v672 = vadd.f32 %v648, %v664
        %v673 = vrot.slane %v665, 1
        %v674 = vrot.slane %v666, 1
        %v675 = vrot.slane %v667, 1
        %v676 = vrot.slane %v668, 1
        %v677 = vrot.slane %v669, 1
        %v678 = vrot.slane %v670, 1
        %v679 = vrot.slane %v671, 1
        %v680 = vrot.slane %v672, 1
        %v681 = vsel %vm279, %v679, %v680
        %v682 = vsel %vm279, %v678, %v679
        %v683 = vsel %vm279, %v677, %v678
        %v684 = vsel %vm279, %v676, %v677
        %v685 = vsel %vm279, %v675, %v676
        %v686 = vsel %vm279, %v674, %v675
        %v687 = vsel %vm279, %v673, %v674
        %v688 = vsel %vm279, %v680, %v673
        %v689 = vadd.f32 %v665, %v687
        %v690 = vadd.f32 %v666, %v686
        %v691 = vadd.f32 %v667, %v685
        %v692 = vadd.f32 %v668, %v684
        %v693 = vadd.f32 %v669, %v683
        %v694 = vadd.f32 %v670, %v682
        %v695 = vadd.f32 %v671, %v681
        %v696 = vadd.f32 %v672, %v688
        %v697 = vrot.slane %v665, 2
        %v698 = vrot.slane %v666, 2
        %v699 = vrot.slane %v667, 2
        %v700 = vrot.slane %v668, 2
        %v701 = vrot.slane %v669, 2
        %v702 = vrot.slane %v670, 2
        %v703 = vrot.slane %v671, 2
        %v704 = vrot.slane %v672, 2
        %v705 = vsel %vm304, %v703, %v704
        %v706 = vsel %vm304, %v702, %v703
        %v707 = vsel %vm304, %v701, %v702
        %v708 = vsel %vm304, %v700, %v701
        %v709 = vsel %vm304, %v699, %v700
        %v710 = vsel %vm304, %v698, %v699
        %v711 = vsel %vm304, %v697, %v698
        %v712 = vsel %vm304, %v704, %v697
        %v713 = vadd.f32 %v689, %v711
        %v714 = vadd.f32 %v690, %v710
        %v715 = vadd.f32 %v691, %v709
        %v716 = vadd.f32 %v692, %v708
        %v717 = vadd.f32 %v693, %v707
        %v718 = vadd.f32 %v694, %v706
        %v719 = vadd.f32 %v695, %v705
        %v720 = vadd.f32 %v696, %v712
        %v721 = vmul.f32 %v489, %v505
        %v722 = vmul.f32 %v490, %v506
        %v723 = vmul.f32 %v491, %v507
        %v724 = vmul.f32 %v492, %v508
        %v725 = vmul.f32 %v493, %v509
        %v726 = vmul.f32 %v494, %v510
        %v727 = vmul.f32 %v495, %v511
        %v728 = vmul.f32 %v496, %v512
        %729 = vrot.lane.b32.xlu0 %v721, 127
        %v730 = vpop.permute.xlu0 %729
        %731 = vrot.lane.b32.xlu0 %v722, 127
        %v732 = vpop.permute.xlu0 %731
        %733 = vrot.lane.b32.xlu0 %v723, 127
        %v734 = vpop.permute.xlu0 %733
        %735 = vrot.lane.b32.xlu0 %v724, 127
        %v736 = vpop.permute.xlu0 %735
        %737 = vrot.lane.b32.xlu0 %v725, 127
        %v738 = vpop.permute.xlu0 %737
        %739 = vrot.lane.b32.xlu0 %v726, 127
        %v740 = vpop.permute.xlu0 %739
        %741 = vrot.lane.b32.xlu0 %v727, 127
        %v742 = vpop.permute.xlu0 %741
        %743 = vrot.lane.b32.xlu0 %v728, 127
        %v744 = vpop.permute.xlu0 %743
        %v745 = vadd.f32 %v721, %v730
        %v746 = vadd.f32 %v722, %v732
        %v747 = vadd.f32 %v723, %v734
        %v748 = vadd.f32 %v724, %v736
        %v749 = vadd.f32 %v725, %v738
        %v750 = vadd.f32 %v726, %v740
        %v751 = vadd.f32 %v727, %v742
        %v752 = vadd.f32 %v728, %v744
        %753 = vrot.lane.b32.xlu0 %v721, 126
        %v754 = vpop.permute.xlu0 %753
        %755 = vrot.lane.b32.xlu0 %v722, 126
        %v756 = vpop.permute.xlu0 %755
        %757 = vrot.lane.b32.xlu0 %v723, 126
        %v758 = vpop.permute.xlu0 %757
        %759 = vrot.lane.b32.xlu0 %v724, 126
        %v760 = vpop.permute.xlu0 %759
        %761 = vrot.lane.b32.xlu0 %v725, 126
        %v762 = vpop.permute.xlu0 %761
        %763 = vrot.lane.b32.xlu0 %v726, 126
        %v764 = vpop.permute.xlu0 %763
        %765 = vrot.lane.b32.xlu0 %v727, 126
        %v766 = vpop.permute.xlu0 %765
        %767 = vrot.lane.b32.xlu0 %v728, 126
        %v768 = vpop.permute.xlu0 %767
        %v769 = vadd.f32 %v745, %v754
        %v770 = vadd.f32 %v746, %v756
        %v771 = vadd.f32 %v747, %v758
        %v772 = vadd.f32 %v748, %v760
        %v773 = vadd.f32 %v749, %v762
        %v774 = vadd.f32 %v750, %v764
        %v775 = vadd.f32 %v751, %v766
        %v776 = vadd.f32 %v752, %v768
        %v777 = vrot.slane %v769, 1
        %v778 = vrot.slane %v770, 1
        %v779 = vrot.slane %v771, 1
        %v780 = vrot.slane %v772, 1
        %v781 = vrot.slane %v773, 1
        %v782 = vrot.slane %v774, 1
        %v783 = vrot.slane %v775, 1
        %v784 = vrot.slane %v776, 1
        %v785 = vsel %vm279, %v783, %v784
        %v786 = vsel %vm279, %v782, %v783
        %v787 = vsel %vm279, %v781, %v782
        %v788 = vsel %vm279, %v780, %v781
        %v789 = vsel %vm279, %v779, %v780
        %v790 = vsel %vm279, %v778, %v779
        %v791 = vsel %vm279, %v777, %v778
        %v792 = vsel %vm279, %v784, %v777
        %v793 = vadd.f32 %v769, %v791
        %v794 = vadd.f32 %v770, %v790
        %v795 = vadd.f32 %v771, %v789
        %v796 = vadd.f32 %v772, %v788
        %v797 = vadd.f32 %v773, %v787
        %v798 = vadd.f32 %v774, %v786
        %v799 = vadd.f32 %v775, %v785
        %v800 = vadd.f32 %v776, %v792
        %v801 = vrot.slane %v769, 2
        %v802 = vrot.slane %v770, 2
        %v803 = vrot.slane %v771, 2
        %v804 = vrot.slane %v772, 2
        %v805 = vrot.slane %v773, 2
        %v806 = vrot.slane %v774, 2
        %v807 = vrot.slane %v775, 2
        %v808 = vrot.slane %v776, 2
        %v809 = vsel %vm304, %v807, %v808
        %v810 = vsel %vm304, %v806, %v807
        %v811 = vsel %vm304, %v805, %v806
        %v812 = vsel %vm304, %v804, %v805
        %v813 = vsel %vm304, %v803, %v804
        %v814 = vsel %vm304, %v802, %v803
        %v815 = vsel %vm304, %v801, %v802
        %v816 = vsel %vm304, %v808, %v801
        %v817 = vadd.f32 %v793, %v815
        %v818 = vadd.f32 %v794, %v814
        %v819 = vadd.f32 %v795, %v813
        %v820 = vadd.f32 %v796, %v812
        %v821 = vadd.f32 %v797, %v811
        %v822 = vadd.f32 %v798, %v810
        %v823 = vadd.f32 %v799, %v809
        %v824 = vadd.f32 %v800, %v816
        %v825 = vrot.slane %v313, 1
        %v826 = vrot.slane %v314, 1
        %v827 = vrot.slane %v315, 1
        %v828 = vrot.slane %v316, 1
        %v829 = vrot.slane %v317, 1
        %v830 = vrot.slane %v318, 1
        %v831 = vrot.slane %v319, 1
        %v832 = vrot.slane %v320, 1
        %v833 = vsel %vm279, %v831, %v832
        %v834 = vsel %vm279, %v830, %v831
        %v835 = vsel %vm279, %v829, %v830
        %v836 = vsel %vm279, %v828, %v829
        %v837 = vsel %vm279, %v827, %v828
        %v838 = vsel %vm279, %v826, %v827
        %v839 = vsel %vm279, %v825, %v826
        %v840 = vsel %vm279, %v832, %v825
        %841 = vrot.lane.b32.xlu0 %v839, 127
        %v842 = vpop.permute.xlu0 %841
        %843 = vrot.lane.b32.xlu0 %v838, 127
        %v844 = vpop.permute.xlu0 %843
        %845 = vrot.lane.b32.xlu0 %v837, 127
        %v846 = vpop.permute.xlu0 %845
        %847 = vrot.lane.b32.xlu0 %v836, 127
        %v848 = vpop.permute.xlu0 %847
        %849 = vrot.lane.b32.xlu0 %v835, 127
        %v850 = vpop.permute.xlu0 %849
        %851 = vrot.lane.b32.xlu0 %v834, 127
        %v852 = vpop.permute.xlu0 %851
        %853 = vrot.lane.b32.xlu0 %v833, 127
        %v854 = vpop.permute.xlu0 %853
        %855 = vrot.lane.b32.xlu0 %v840, 127
        %v856 = vpop.permute.xlu0 %855
        %v857 = vrot.slane %v409, 1
        %v858 = vrot.slane %v410, 1
        %v859 = vrot.slane %v411, 1
        %v860 = vrot.slane %v412, 1
        %v861 = vrot.slane %v413, 1
        %v862 = vrot.slane %v414, 1
        %v863 = vrot.slane %v415, 1
        %v864 = vrot.slane %v416, 1
        %v865 = vsel %vm279, %v863, %v864
        %v866 = vsel %vm279, %v862, %v863
        %v867 = vsel %vm279, %v861, %v862
        %v868 = vsel %vm279, %v860, %v861
        %v869 = vsel %vm279, %v859, %v860
        %v870 = vsel %vm279, %v858, %v859
        %v871 = vsel %vm279, %v857, %v858
        %v872 = vsel %vm279, %v864, %v857
        %873 = vrot.lane.b32.xlu0 %v871, 127
        %v874 = vpop.permute.xlu0 %873
        %875 = vrot.lane.b32.xlu0 %v870, 127
        %v876 = vpop.permute.xlu0 %875
        %877 = vrot.lane.b32.xlu0 %v869, 127
        %v878 = vpop.permute.xlu0 %877
        %879 = vrot.lane.b32.xlu0 %v868, 127
        %v880 = vpop.permute.xlu0 %879
        %881 = vrot.lane.b32.xlu0 %v867, 127
        %v882 = vpop.permute.xlu0 %881
        %883 = vrot.lane.b32.xlu0 %v866, 127
        %v884 = vpop.permute.xlu0 %883
        %885 = vrot.lane.b32.xlu0 %v865, 127
        %v886 = vpop.permute.xlu0 %885
        %887 = vrot.lane.b32.xlu0 %v872, 127
        %v888 = vpop.permute.xlu0 %887
        %v889 = vmul.f32 %v842, 2.0
        %v890 = vmul.f32 %v844, 2.0
        %v891 = vmul.f32 %v846, 2.0
        %v892 = vmul.f32 %v848, 2.0
        %v893 = vmul.f32 %v850, 2.0
        %v894 = vmul.f32 %v852, 2.0
        %v895 = vmul.f32 %v854, 2.0
        %v896 = vmul.f32 %v856, 2.0
        %v897 = vmul.f32 %v889, %v874
        %v898 = vmul.f32 %v890, %v876
        %v899 = vmul.f32 %v891, %v878
        %v900 = vmul.f32 %v892, %v880
        %v901 = vmul.f32 %v893, %v882
        %v902 = vmul.f32 %v894, %v884
        %v903 = vmul.f32 %v895, %v886
        %v904 = vmul.f32 %v896, %v888
        %v905 = vadd.f32 %v897, 0.0081
        %v906 = vadd.f32 %v898, 0.0081
        %v907 = vadd.f32 %v899, 0.0081
        %v908 = vadd.f32 %v900, 0.0081
        %v909 = vadd.f32 %v901, 0.0081
        %v910 = vadd.f32 %v902, 0.0081
        %v911 = vadd.f32 %v903, 0.0081
        %v912 = vadd.f32 %v904, 0.0081
        %v913 = vmul.f32 %v817, 2.0
        %v914 = vmul.f32 %v818, 2.0
        %v915 = vmul.f32 %v819, 2.0
        %v916 = vmul.f32 %v820, 2.0
        %v917 = vmul.f32 %v821, 2.0
        %v918 = vmul.f32 %v822, 2.0
        %v919 = vmul.f32 %v823, 2.0
        %v920 = vmul.f32 %v824, 2.0
        %v921 = vadd.f32 %v913, 0.6561
        %v922 = vadd.f32 %v914, 0.6561
        %v923 = vadd.f32 %v915, 0.6561
        %v924 = vadd.f32 %v916, 0.6561
        %v925 = vadd.f32 %v917, 0.6561
        %v926 = vadd.f32 %v918, 0.6561
        %v927 = vadd.f32 %v919, 0.6561
        %v928 = vadd.f32 %v920, 0.6561
        %v929 = vmul.f32 %v905, %v921
        %v930 = vmul.f32 %v906, %v922
        %v931 = vmul.f32 %v907, %v923
        %v932 = vmul.f32 %v908, %v924
        %v933 = vmul.f32 %v909, %v925
        %v934 = vmul.f32 %v910, %v926
        %v935 = vmul.f32 %v911, %v927
        %v936 = vmul.f32 %v912, %v928
        %v937 = vmul.f32 %v842, %v842
        %v938 = vmul.f32 %v844, %v844
        %v939 = vmul.f32 %v846, %v846
        %v940 = vmul.f32 %v848, %v848
        %v941 = vmul.f32 %v850, %v850
        %v942 = vmul.f32 %v852, %v852
        %v943 = vmul.f32 %v854, %v854
        %v944 = vmul.f32 %v856, %v856
        %v945 = vmul.f32 %v874, %v874
        %v946 = vmul.f32 %v876, %v876
        %v947 = vmul.f32 %v878, %v878
        %v948 = vmul.f32 %v880, %v880
        %v949 = vmul.f32 %v882, %v882
        %v950 = vmul.f32 %v884, %v884
        %v951 = vmul.f32 %v886, %v886
        %v952 = vmul.f32 %v888, %v888
        %v953 = vadd.f32 %v937, %v945
        %v954 = vadd.f32 %v938, %v946
        %v955 = vadd.f32 %v939, %v947
        %v956 = vadd.f32 %v940, %v948
        %v957 = vadd.f32 %v941, %v949
        %v958 = vadd.f32 %v942, %v950
        %v959 = vadd.f32 %v943, %v951
        %v960 = vadd.f32 %v944, %v952
        %v961 = vadd.f32 %v953, 0.0081
        %v962 = vadd.f32 %v954, 0.0081
        %v963 = vadd.f32 %v955, 0.0081
        %v964 = vadd.f32 %v956, 0.0081
        %v965 = vadd.f32 %v957, 0.0081
        %v966 = vadd.f32 %v958, 0.0081
        %v967 = vadd.f32 %v959, 0.0081
        %v968 = vadd.f32 %v960, 0.0081
        %v969 = vadd.f32 %v609, %v713
        %v970 = vadd.f32 %v610, %v714
        %v971 = vadd.f32 %v611, %v715
        %v972 = vadd.f32 %v612, %v716
        %v973 = vadd.f32 %v613, %v717
        %v974 = vadd.f32 %v614, %v718
        %v975 = vadd.f32 %v615, %v719
        %v976 = vadd.f32 %v616, %v720
        %v977 = vadd.f32 %v969, 0.6561
        %v978 = vadd.f32 %v970, 0.6561
        %v979 = vadd.f32 %v971, 0.6561
        %v980 = vadd.f32 %v972, 0.6561
        %v981 = vadd.f32 %v973, 0.6561
        %v982 = vadd.f32 %v974, 0.6561
        %v983 = vadd.f32 %v975, 0.6561
        %v984 = vadd.f32 %v976, 0.6561
        %v985 = vmul.f32 %v961, %v977
        %v986 = vmul.f32 %v962, %v978
        %v987 = vmul.f32 %v963, %v979
        %v988 = vmul.f32 %v964, %v980
        %v989 = vmul.f32 %v965, %v981
        %v990 = vmul.f32 %v966, %v982
        %v991 = vmul.f32 %v967, %v983
        %v992 = vmul.f32 %v968, %v984
        %v993 = vrcp.pop %v985
        %v994 = vrcp.pop %v986
        %v995 = vrcp.pop %v987
        %v996 = vrcp.pop %v988
        %v997 = vrcp.pop %v989
        %v998 = vrcp.pop %v990
        %v999 = vrcp.pop %v991
        %v1000 = vrcp.pop %v992
        %v1001 = vmul.f32 %v929, %v993
        %v1002 = vmul.f32 %v930, %v994
        %v1003 = vmul.f32 %v931, %v995
        %v1004 = vmul.f32 %v932, %v996
        %v1005 = vmul.f32 %v933, %v997
        %v1006 = vmul.f32 %v934, %v998
        %v1007 = vmul.f32 %v935, %v999
        %v1008 = vmul.f32 %v936, %v1000
        %v1009 = vsub.f32 1.0, %v1001
        %v1010 = vsub.f32 1.0, %v1002
        %v1011 = vsub.f32 1.0, %v1003
        %v1012 = vsub.f32 1.0, %v1004
        %v1013 = vsub.f32 1.0, %v1005
        %v1014 = vsub.f32 1.0, %v1006
        %v1015 = vsub.f32 1.0, %v1007
        %v1016 = vsub.f32 1.0, %v1008
        %v1017 = vmax.f32 %v1009, 0.0
        %v1018 = vmax.f32 %v1010, 0.0
        %v1019 = vmax.f32 %v1011, 0.0
        %v1020 = vmax.f32 %v1012, 0.0
        %v1021 = vmax.f32 %v1013, 0.0
        %v1022 = vmax.f32 %v1014, 0.0
        %v1023 = vmax.f32 %v1015, 0.0
        %v1024 = vmax.f32 %v1016, 0.0
        %v1025 = vmin.f32 %v1017, 2.0
        %v1026 = vmin.f32 %v1018, 2.0
        %v1027 = vmin.f32 %v1019, 2.0
        %v1028 = vmin.f32 %v1020, 2.0
        %v1029 = vmin.f32 %v1021, 2.0
        %v1030 = vmin.f32 %v1022, 2.0
        %v1031 = vmin.f32 %v1023, 2.0
        %v1032 = vmin.f32 %v1024, 2.0
        %1033 = vst [vmem:[%s201] sm:$0xff] %v1025
        %1034 = vst [vmem:[%s201 + $0x8] sm:$0xff] %v1026
        %1035 = vst [vmem:[%s201 + $0x10] sm:$0xff] %v1027
        %1036 = vst [vmem:[%s201 + $0x18] sm:$0xff] %v1028
        %1037 = vst [vmem:[%s201 + $0x20] sm:$0xff] %v1029
        %1038 = vst [vmem:[%s201 + $0x28] sm:$0xff] %v1030
        %1039 = vst [vmem:[%s201 + $0x30] sm:$0xff] %v1031
        %1040 = vst [vmem:[%s201 + $0x38] sm:$0xff] %v1032
        %s1041 = sand.u32 %s82, 1
        %s1042 = scalar_lea.sflag [#allocation4], %s1041
        %s1043 = sand.u32 %s82, 1
        %s1044 = smul.addr %s1043, 64
        %s1045 = scalar_lea.vmem [#allocation7], %s1044
        // Predicated region
        $region37: #{tpu_custom_call.1} parent=27 // pred_check
          %p1046 = pneg %p92
        $region38: #{tpu_custom_call.1} parent=27 // pred_check_branch
          %1048 = sbr.rel (%p1046) target = $region40
        $region39: #{tpu_custom_call.1} parent=27 // pred_region
          %s1049 = smul.u32 8, %s22
          %s1051 = ssub.s32 1024, 1024
          %1052 = vsyncadd %s1042, %s1051
          %s1053 = smul.addr %s1049, 128
          %s1054 = scalar_lea.hbm %s2, %s1053
          %s1055 = sshll.u32 %s1045, 4
          %s1056 = int_to_ptr.vmem [resolvable:$true] %s1055
          %1061 = dma.vmem_to_hbm [thread:$0]  %s1056, 1024, %s1054, %s1042, 128, 128, 8
        $region40: #{tpu_custom_call.1} parent=27 // pred_fallthru
          _
      $region28: #{tpu_custom_call.1} parent=5 // pred_fallthru
        _
      %p1062 = scmp.le.s32.totalorder 2, %s17
      // Predicated region
      $region41: #{tpu_custom_call.1} parent=5 // pred_check
        %p1063 = pneg %p1062
      $region42: #{tpu_custom_call.1} parent=5 // pred_check_branch
        %1065 = sbr.rel (%p1063) target = $region44
      $region43: #{tpu_custom_call.1} parent=5 // pred_region
        %s1066 = ssub.s32 %s17, 2
        // Predicated region
        $region45: #{tpu_custom_call.1} parent=43 // pred_check
          %p1067 = pneg %p98
        $region46: #{tpu_custom_call.1} parent=43 // pred_check_branch
          %1069 = sbr.rel (%p1067) target = $region48
        $region47: #{tpu_custom_call.1} parent=43 // pred_region
          %s1070 = sand.u32 %s83, 1
          %s1071 = scalar_lea.sflag [#allocation4], %s1070
          %s1072 = sand.u32 %s83, 1
          %s1073 = smul.addr %s1072, 64
          %s1074 = scalar_lea.vmem [#allocation7], %s1073
          %1075 = dma.done %s1071, 1024
        $region48: #{tpu_custom_call.1} parent=43 // pred_fallthru
          _
      $region44: #{tpu_custom_call.1} parent=5 // pred_fallthru
        _
    $region6: #{tpu_custom_call.1} parent=1 // loop_footer
      %s21 = sadd.s32 1, %s17
    $region7: #{tpu_custom_call.1} parent=1 // loop_footer_branch
      %16 = sbr.rel target = $region3
    $region8: #{tpu_custom_call.1} parent=1 // loop_exit
      _
    %1076 = vsyncpa [#allocation3], 1
    %s1077 = scalar_lea.sflag [#allocation3], 1
    %1078 = vsyncpa %s1077, 1
    %1079 = vsyncpa [#allocation6], 1
    %s1080 = scalar_lea.sflag [#allocation6], 1
    %1081 = vsyncpa %s1080, 1
    %1082 = vsyncpa [#allocation4], 1
    %s1083 = scalar_lea.sflag [#allocation4], 1
    %1084 = vsyncpa %s1083, 1

</llo_original>
